<compile_context>
chip_gen: v5e
topology: v5e:2x2
jax: 0.10.0
libtpu: 0.0.40
codegen_flags: <defaults>
</compile_context>

<pallas_src>
import jax
import jax.numpy as jnp
from jax.experimental import pallas as pl
from jax.experimental.pallas import tpu as pltpu

NEG_FILL = -1.0e9
BLK = 128                                       # lane width of one output block
PLAIN_HEADS = (("attack_style", 3), ("comm", 127), ("move", 5))
PLAIN_W = len(PLAIN_HEADS) * BLK                # 384: three lane-aligned plain-head blocks
_MAX_B_TILE = 128                               # batch rows per grid step


def _round_up(x, m):
    return ((x + m - 1) // m) * m


# --------------------------------------------------------------------------
# Fused kernel: one wide bf16 MXU matmul + target scores + mask fills, ONE store
# --------------------------------------------------------------------------
def _action_decoder_kernel(h_ref, w_ref, b_ref, mask_ref, emb_ref, out_ref):
    H = h_ref.shape[1]

    # One bf16 MXU push for all four heads: (TB,H) @ (H, 384 + pad128(H)), f32 acc.
    h_bf16 = h_ref[...].astype(w_ref.dtype)
    full = jnp.dot(h_bf16, w_ref[...], preferred_element_type=jnp.float32)
    full = full + b_ref[...]

    # attack_target: Linear(H,H) slice of `full`, then (TB,TGT_W,H)·(TB,H).
    # emb_ref is already zero-padded to the 128-lane target width, so padded
    # columns score exactly 0 (== the reference's appended zero-embedding row).
    # TODO(synk): at large T/H route this contraction through the MXU (batched
    # einsum) instead of the VPU multiply + XLU lane reduce used here.
    h2 = full[:, PLAIN_W:PLAIN_W + H]                                   # (TB, H) f32
    scores = jnp.sum(
        emb_ref[...].astype(jnp.float32) * h2[:, None, :], axis=-1
    )                                                                   # (TB, TGT_W)

    # Compose [style | comm | move | target] in registers (both pieces 128-lane
    # aligned), mask once, store once: a single unmasked lane-dense vst.
    logits = jnp.concatenate([full[:, :PLAIN_W], scores], axis=-1)
    out_ref[...] = jnp.where(mask_ref[...] == 0, NEG_FILL, logits).astype(out_ref.dtype)


def _decode(hidden, w_slab, b_slab, mask_slab, emb_padded):
    B, H = hidden.shape
    tgt_rows = emb_padded.shape[1]
    out_w = mask_slab.shape[1]
    w_w = w_slab.shape[1]

    tb = B if B <= _MAX_B_TILE else _MAX_B_TILE
    grid = (pl.cdiv(B, tb),)

    return pl.pallas_call(
        _action_decoder_kernel,
        out_shape=jax.ShapeDtypeStruct((B, out_w), jnp.float32),
        grid_spec=pltpu.PrefetchScalarGridSpec(
            num_scalar_prefetch=0,
            grid=grid,
            in_specs=[
                pl.BlockSpec((tb, H), lambda i: (i, 0)),               # hidden (B-tiled)
                pl.BlockSpec((H, w_w), lambda i: (0, 0)),              # weights (resident)
                pl.BlockSpec((1, w_w), lambda i: (0, 0)),              # bias    (resident)
                pl.BlockSpec((tb, out_w), lambda i: (i, 0)),           # mask    (B-tiled)
                pl.BlockSpec((tb, tgt_rows, H), lambda i: (i, 0, 0)),  # embeddings
            ],
            out_specs=pl.BlockSpec((tb, out_w), lambda i: (i, 0)),
        ),
        compiler_params=pltpu.CompilerParams(
            dimension_semantics=("parallel",),       # v7x: shard batch over 2 TCs
            vmem_limit_bytes=48 * 1024 * 1024,       # headroom beyond 16/32 MiB defaults
        ),
    )(hidden, w_slab, b_slab, mask_slab, emb_padded)


@jax.jit
def _forward(w_slab, b_slab, hidden, player_embeddings,
             m_style, m_target, m_comm, m_move):
    B = hidden.shape[0]
    T_emb = player_embeddings.shape[1]
    t_mask = m_target.shape[1]
    tgt_w = _round_up(max(t_mask, T_emb), BLK)

    # int32 mask slab built with ONE concatenate; each head owns a 128-lane
    # aligned block: [style | comm | move | target].  Padding lanes are 0.
    def pad_block(m, width):
        pieces = [m.astype(jnp.int32)]
        if width > m.shape[1]:
            pieces.append(jnp.zeros((B, width - m.shape[1]), jnp.int32))
        return pieces

    mask_slab = jnp.concatenate(
        pad_block(m_style, BLK) + pad_block(m_comm, BLK)
        + pad_block(m_move, BLK) + pad_block(m_target, tgt_w), axis=1)

    # Zero-pad player embeddings to the 128-lane target block width (padded rows
    # reproduce the reference's "no target" zero-embedding row) and ship as bf16.
    emb = player_embeddings.astype(jnp.bfloat16)
    if T_emb < tgt_w:
        emb = jnp.pad(emb, ((0, 0), (0, tgt_w - T_emb), (0, 0)))

    out = _decode(hidden, w_slab, b_slab, mask_slab, emb)

    out_style = out[:, 0:3]
    out_comm = out[:, BLK:BLK + 127]
    out_move = out[:, 2 * BLK:2 * BLK + 5]
    out_target = out[:, PLAIN_W:PLAIN_W + t_mask]
    # ModuleDict iteration order: attack_style, attack_target, comm, move
    return out_style, out_target, out_comm, out_move


# --------------------------------------------------------------------------
# Module equivalent
# --------------------------------------------------------------------------
class ActionDecoderPallas:
    """Pallas port of ActionDecoder. Parameters initialized deterministically."""

    def __init__(self, input_size, hidden_size, key):
        del input_size  # unused, exactly like the PyTorch reference module
        self.hidden_size = H = hidden_size
        bound = 1.0 / float(H) ** 0.5
        sizes = {"attack_style": 3, "attack_target": H, "comm": 127, "move": 5}
        self.params = {}
        for i, (name, out_dim) in enumerate(sizes.items()):
            kw, kb = jax.random.split(jax.random.fold_in(key, i))
            w = jax.random.uniform(kw, (H, out_dim), jnp.float32, -bound, bound)
            b = jax.random.uniform(kb, (1, out_dim), jnp.float32, -bound, bound)
            self.params[name] = (w, b)

        # Lane-aligned parameter slab, built ONCE here (not in the per-call path).
        # Column layout: [attack_style | comm | move | attack_target], each head
        # starting on a 128-lane boundary; unused columns are zero.
        w_width = PLAIN_W + _round_up(H, BLK)
        w_slab = jnp.zeros((H, w_width), jnp.float32)
        b_slab = jnp.zeros((1, w_width), jnp.float32)
        for blk, (name, out_dim) in enumerate(PLAIN_HEADS):
            w, b = self.params[name]
            w_slab = w_slab.at[:, blk * BLK: blk * BLK + out_dim].set(w)
            b_slab = b_slab.at[:, blk * BLK: blk * BLK + out_dim].set(b)
        w_t, b_t = self.params["attack_target"]
        w_slab = w_slab.at[:, PLAIN_W:PLAIN_W + H].set(w_t)
        b_slab = b_slab.at[:, PLAIN_W:PLAIN_W + H].set(b_t)
        # bf16 weights feed the MXU at native rate (accumulation stays f32 in
        # kernel); bias stays f32 since it is added after accumulation.
        self.w_slab = jax.device_put(w_slab.astype(jnp.bfloat16))
        self.b_slab = jax.device_put(b_slab)

    def __call__(self, hidden, lookup):
        player_embeddings, action_targets = lookup
        out_style, out_target, out_comm, out_move = _forward(
            self.w_slab, self.b_slab, hidden, player_embeddings,
            action_targets["Attack"]["Style"],
            action_targets["Attack"]["Target"],
            action_targets["Comm"]["Token"],
            action_targets["Move"]["Direction"],
        )
        return [out_style, out_target, out_comm, out_move]


# --------------------------------------------------------------------------
# Pure-JAX reference (same bf16 rounding of weights/hidden/embeddings as kernel)
# --------------------------------------------------------------------------
def _reference(decoder, hidden, lookup):
    HIGH = jax.lax.Precision.HIGHEST
    rq = lambda x: x.astype(jnp.bfloat16).astype(jnp.float32)   # bf16 round-trip
    player_embeddings, action_targets = lookup
    masks = {
        "attack_style": action_targets["Attack"]["Style"],
        "attack_target": action_targets["Attack"]["Target"],
        "comm": action_targets["Comm"]["Token"],
        "move": action_targets["Move"]["Direction"],
    }
    hq = rq(hidden)
    outs = []
    for name in ["attack_style", "attack_target", "comm", "move"]:
        w, b = decoder.params[name]
        h = jnp.dot(hq, rq(w), precision=HIGH) + b
        if name == "attack_target":
            embs = player_embeddings
            if embs.shape[1] != masks[name].shape[1]:
                zeros = jnp.zeros((embs.shape[0], 1, embs.shape[2]), embs.dtype)
                embs = jnp.concatenate([embs, zeros], axis=1)
            h = jnp.einsum("bth,bh->bt", rq(embs), h, precision=HIGH)
        h = jnp.where(masks[name] == 0, NEG_FILL, h)
        outs.append(h)
    return outs


# --------------------------------------------------------------------------
if __name__ == "__main__":
    key = jax.random.PRNGKey(0)
    B, H = 8, 32           # batch kept a multiple of 8 (full f32 sublane groups)
    N_PLAYERS = 7          # player embedding rows
    N_TARGETS = 8          # attack-target mask width (triggers "no target" padding)

    k_param, k_hidden, k_emb, k_m1, k_m2, k_m3, k_m4 = jax.random.split(key, 7)

    decoder = ActionDecoderPallas(input_size=H, hidden_size=H, key=k_param)

    hidden = jax.random.normal(k_hidden, (B, H), jnp.float32)
    player_embeddings = jax.random.normal(k_emb, (B, N_PLAYERS, H), jnp.float32)

    action_targets = {
        "Attack": {
            "Style": jax.random.bernoulli(k_m1, 0.7, (B, 3)).astype(jnp.int32),
            "Target": jax.random.bernoulli(k_m2, 0.7, (B, N_TARGETS)).astype(jnp.int32),
        },
        "Comm": {
            "Token": jax.random.bernoulli(k_m3, 0.7, (B, 127)).astype(jnp.int32),
        },
        "Move": {
            "Direction": jax.random.bernoulli(k_m4, 0.7, (B, 5)).astype(jnp.int32),
        },
    }
    lookup = (player_embeddings, action_targets)

    actions = decoder(hidden, lookup)
    actions = [jax.block_until_ready(a) for a in actions]

    # sanity check vs pure-JAX reference
    ref = _reference(decoder, hidden, lookup)
    for a, r in zip(actions, ref):
        assert a.shape == r.shape, (a.shape, r.shape)
        assert jnp.allclose(a, r, atol=2e-3, rtol=2e-3), "mismatch vs reference"

    print("KERNEL_OK")
</pallas_src>

<mosaic_0001>
module attributes {stable_mosaic.version = 11 : i64} {
  func.func @_action_decoder_kernel(%arg0: i32, %arg1: memref<8x32xf32, #tpu.memory_space<vmem>>, %arg2: memref<32x512xbf16, #tpu.memory_space<vmem>>, %arg3: memref<1x512xf32, #tpu.memory_space<vmem>>, %arg4: memref<8x512xi32, #tpu.memory_space<vmem>>, %arg5: memref<8x128x32xbf16, #tpu.memory_space<vmem>>, %arg6: memref<8x512xf32, #tpu.memory_space<vmem>>) attributes {dimension_semantics = [#tpu.dimension_semantics<parallel>], iteration_bounds = array<i64: 1>, scalar_prefetch = 0 : i64, scratch_operands = 0 : i64, tpu.core_type = #tpu.core_type<tc>, window_params = [{transform_indices = @transform_0, window_bounds = array<i64: 8, 32>}, {pipeline_mode = #tpu.pipeline_mode<synchronous>, transform_indices = @transform_1, window_bounds = array<i64: 32, 512>}, {pipeline_mode = #tpu.pipeline_mode<synchronous>, transform_indices = @transform_2, window_bounds = array<i64: 1, 512>}, {transform_indices = @transform_3, window_bounds = array<i64: 8, 512>}, {transform_indices = @transform_4, window_bounds = array<i64: 8, 128, 32>}, {transform_indices = @transform_5, window_bounds = array<i64: 8, 512>}]} {
    %c0 = arith.constant 0 : index
    %c0_0 = arith.constant 0 : index
    %0 = vector.load %arg1[%c0, %c0_0] : memref<8x32xf32, #tpu.memory_space<vmem>>, vector<8x32xf32>
    %1 = arith.truncf %0 : vector<8x32xf32> to vector<8x32xbf16>
    %c0_1 = arith.constant 0 : index
    %c0_2 = arith.constant 0 : index
    %2 = vector.load %arg2[%c0_1, %c0_2] : memref<32x512xbf16, #tpu.memory_space<vmem>>, vector<32x512xbf16>
    %cst = arith.constant dense<0.000000e+00> : vector<8x512xf32>
    %3 = tpu.matmul %1, %2, %cst {dimension_numbers = #tpu.dot_dimension_numbers<[1], [0], [0], [1], [0, 0, 1, 1], [], []>} : vector<8x32xbf16>, vector<32x512xbf16>, vector<8x512xf32> -> vector<8x512xf32>
    %c0_3 = arith.constant 0 : index
    %c0_4 = arith.constant 0 : index
    %4 = vector.load %arg3[%c0_3, %c0_4] : memref<1x512xf32, #tpu.memory_space<vmem>>, vector<1x512xf32>
    %5 = vector.broadcast %4 : vector<1x512xf32> to vector<8x512xf32>
    %6 = arith.addf %3, %5 : vector<8x512xf32>
    %7 = vector.extract_strided_slice %6 {offsets = [0, 384], sizes = [8, 32], strides = [1, 1]} : vector<8x512xf32> to vector<8x32xf32>
    %c0_5 = arith.constant 0 : index
    %c0_6 = arith.constant 0 : index
    %c0_7 = arith.constant 0 : index
    %8 = vector.load %arg5[%c0_5, %c0_6, %c0_7] : memref<8x128x32xbf16, #tpu.memory_space<vmem>>, vector<8x128x32xbf16>
    %9 = arith.extf %8 : vector<8x128x32xbf16> to vector<8x128x32xf32>
    %10 = vector.shape_cast %7 : vector<8x32xf32> to vector<8x1x32xf32>
    %11 = vector.broadcast %10 : vector<8x1x32xf32> to vector<8x128x32xf32>
    %12 = arith.mulf %9, %11 : vector<8x128x32xf32>
    %cst_8 = arith.constant dense<0.000000e+00> : vector<8x128xf32>
    %13 = vector.multi_reduction <add>, %12, %cst_8 [2] : vector<8x128x32xf32> to vector<8x128xf32>
    %14 = vector.extract_strided_slice %6 {offsets = [0, 0], sizes = [8, 384], strides = [1, 1]} : vector<8x512xf32> to vector<8x384xf32>
    %15 = tpu.concatenate %14, %13 in 1 : vector<8x384xf32>, vector<8x128xf32> -> vector<8x512xf32>
    %c0_9 = arith.constant 0 : index
    %c0_10 = arith.constant 0 : index
    %16 = vector.load %arg4[%c0_9, %c0_10] : memref<8x512xi32, #tpu.memory_space<vmem>>, vector<8x512xi32>
    %c0_i32 = arith.constant 0 : i32
    %17 = vector.broadcast %c0_i32 : i32 to vector<8x512xi32>
    %18 = arith.cmpi eq, %16, %17 : vector<8x512xi32>
    %cst_11 = arith.constant -1.000000e+09 : f32
    %19 = vector.broadcast %cst_11 : f32 to vector<8x512xf32>
    %20 = arith.select %18, %19, %15 : vector<8x512xi1>, vector<8x512xf32>
    %c0_12 = arith.constant 0 : index
    %c0_13 = arith.constant 0 : index
    %21 = vector.load %arg6[%c0_12, %c0_13] : memref<8x512xf32, #tpu.memory_space<vmem>>, vector<8x512xf32>
    tpu.vector_store %arg6[%c0_12, %c0_13], %20 {strides = array<i32>} : memref<8x512xf32, #tpu.memory_space<vmem>>, vector<8x512xf32>,
    return
  }
  func.func @transform_0(%arg0: i32) -> (i32, i32) {
    %c0_i32 = arith.constant 0 : i32
    %c0_i32_0 = arith.constant 0 : i32
    return %arg0, %c0_i32 : i32, i32
  }
  func.func @transform_1(%arg0: i32) -> (i32, i32) {
    %c0_i32 = arith.constant 0 : i32
    %c0_i32_0 = arith.constant 0 : i32
    %c0_i32_1 = arith.constant 0 : i32
    return %c0_i32, %c0_i32_0 : i32, i32
  }
  func.func @transform_2(%arg0: i32) -> (i32, i32) {
    %c0_i32 = arith.constant 0 : i32
    %c0_i32_0 = arith.constant 0 : i32
    %c0_i32_1 = arith.constant 0 : i32
    return %c0_i32, %c0_i32_0 : i32, i32
  }
  func.func @transform_3(%arg0: i32) -> (i32, i32) {
    %c0_i32 = arith.constant 0 : i32
    %c0_i32_0 = arith.constant 0 : i32
    return %arg0, %c0_i32 : i32, i32
  }
  func.func @transform_4(%arg0: i32) -> (i32, i32, i32) {
    %c0_i32 = arith.constant 0 : i32
    %c0_i32_0 = arith.constant 0 : i32
    %c0_i32_1 = arith.constant 0 : i32
    return %arg0, %c0_i32, %c0_i32_0 : i32, i32, i32
  }
  func.func @transform_5(%arg0: i32) -> (i32, i32) {
    %c0_i32 = arith.constant 0 : i32
    %c0_i32_0 = arith.constant 0 : i32
    return %arg0, %c0_i32 : i32, i32
  }
}

</mosaic_0001>

<llo_original>
// kernel: _forward.1
$region0: #{_forward.1}
  #allocation0 [shape = 'u32[]', space=smem, size = 0x4, offset = 0x4, fixed_abs, tag = 'smem constant byte address 0x4 - core index']
  #allocation1 [shape = 'u32[72,128]{1,0:T(1,128)}', space=vmem, size = 0x9000, scoped, tag = 'internal scratch']
  %s0 = inlined_call_operand.vmem [shape: f32[8,32], index: 0, kind: input, shape index: {}]
  %s1 = inlined_call_operand.vmem [shape: bf16[32,512], index: 1, kind: input, shape index: {}]
  %s2 = inlined_call_operand.vmem [shape: f32[1,512], index: 2, kind: input, shape index: {}]
  %s3 = inlined_call_operand.vmem [shape: s32[8,512], index: 3, kind: input, shape index: {}]
  %s4 = inlined_call_operand.vmem [shape: bf16[8,128,32], index: 4, kind: input, shape index: {}]
  %s5 = inlined_call_operand.vmem [shape: f32[8,512], index: 5, kind: output, shape index: {}]
  %s6 = sld [smem:[#allocation0]]
  $region30: #{_forward.1} parent=0
    _
  %s8 = ssub.s32 1, %s6
  %s9 = scalar_select 0, %s8, %s6
  // Predicated region
  $region2: #{_forward.1} parent=0 // pred_check
    _
  $region3: #{_forward.1} parent=0 // pred_check_branch
    %11 = sbr.rel (0) target = $region5
  $region4: #{_forward.1} parent=0 // pred_region
    _
  $region5: #{_forward.1} parent=0 // pred_fallthru
    _
  // Predicated region
  $region6: #{_forward.1} parent=0 // pred_check
    _
  $region7: #{_forward.1} parent=0 // pred_check_branch
    %13 = sbr.rel (0) target = $region9
  $region8: #{_forward.1} parent=0 // pred_region
    _
  $region9: #{_forward.1} parent=0 // pred_fallthru
    _
  // Predicated region
  $region10: #{_forward.1} parent=0 // pred_check
    _
  $region11: #{_forward.1} parent=0 // pred_check_branch
    %15 = sbr.rel (0) target = $region13
  $region12: #{_forward.1} parent=0 // pred_region
    _
  $region13: #{_forward.1} parent=0 // pred_fallthru
    _
  // Predicated region
  $region14: #{_forward.1} parent=0 // pred_check
    _
  $region15: #{_forward.1} parent=0 // pred_check_branch
    %17 = sbr.rel (0) target = $region17
  $region16: #{_forward.1} parent=0 // pred_region
    _
  $region17: #{_forward.1} parent=0 // pred_fallthru
    _
  // Predicated region
  $region18: #{_forward.1} parent=0 // pred_check
    _
  $region19: #{_forward.1} parent=0 // pred_check_branch
    %19 = sbr.rel (0) target = $region21
  $region20: #{_forward.1} parent=0 // pred_region
    _
  $region21: #{_forward.1} parent=0 // pred_fallthru
    _
  %v21 = vld [vmem:[%s0] sm:$0xff]
  %v22 = vpack.c.bf16 %v21, %v21
  %v23 = vld [vmem:[%s1] sm:$0xff]
  %v24 = vld [vmem:[%s1 + $0x8] sm:$0xff]
  %v25 = vld [vmem:[%s1 + $0x10] sm:$0xff]
  %v26 = vld [vmem:[%s1 + $0x18] sm:$0xff]
  %v27 = vld [vmem:[%s1 + $0x20] sm:$0xff]
  %v28 = vld [vmem:[%s1 + $0x28] sm:$0xff]
  %v29 = vld [vmem:[%s1 + $0x30] sm:$0xff]
  %v30 = vld [vmem:[%s1 + $0x38] sm:$0xff]
  %v31 = vld [vmem:[%s2] sm:$0xf]
  %v33 = vperm.slane %v31, 0
  %v34 = vperm.slane %v31, 1
  %v35 = vperm.slane %v31, 2
  %v36 = vperm.slane %v31, 3
  %v49 = vunpack.c.l.b16 %v23
  %v50 = vunpack.c.h.b16 %v23
  %v51 = vunpack.c.l.b16 %v24
  %v52 = vunpack.c.h.b16 %v24
  %v53 = vunpack.c.l.b16 %v25
  %v54 = vunpack.c.h.b16 %v25
  %v55 = vunpack.c.l.b16 %v26
  %v56 = vunpack.c.h.b16 %v26
  %v57 = vunpack.c.l.b16 %v27
  %v58 = vunpack.c.h.b16 %v27
  %v59 = vunpack.c.l.b16 %v28
  %v60 = vunpack.c.h.b16 %v28
  %v61 = vunpack.c.l.b16 %v29
  %v62 = vunpack.c.h.b16 %v29
  %v63 = vunpack.c.l.b16 %v30
  %v64 = vunpack.c.h.b16 %v30
  %v65 = vpack.c.b16 %v53, %v49
  %v66 = vpack.c.b16 %v54, %v50
  %v67 = vpack.c.b16 %v55, %v51
  %v68 = vpack.c.b16 %v56, %v52
  %v69 = vpack.c.b16 %v61, %v57
  %v70 = vpack.c.b16 %v62, %v58
  %v71 = vpack.c.b16 %v63, %v59
  %v72 = vpack.c.b16 %v64, %v60
  %vm81 = vcmask 261120
  %v83 = vsel %vm81, %v22, 0
  %85 = vmatpush.bf16.msra.mxu0 0
  %86 = vmatpush.bf16.msra.mxu0 0
  %87 = vmatpush.bf16.msra.mxu0 0
  %88 = vmatpush.bf16.msra.mxu0 0
  %89 = vmatpush.bf16.msra.mxu0 0
  %90 = vmatpush.bf16.msra.mxu0 0
  %91 = vmatpush.bf16.msra.mxu0 %v69
  %92 = vmatpush.bf16.msra.mxu0 %v65
  %93 = vmatmul.bf16.gmra.mxu0 %v83
  %v94 = vpop.f32.mrf.mxu0
  %v95 = vadd.f32 %v33, %v94
  %v96 = vpop.f32.mrf.mxu0
  %97 = vdwg.mxu0
  %98 = vmatpush.bf16.msra.mxu0 0
  %99 = vmatpush.bf16.msra.mxu0 0
  %100 = vmatpush.bf16.msra.mxu0 0
  %101 = vmatpush.bf16.msra.mxu0 0
  %102 = vmatpush.bf16.msra.mxu0 0
  %103 = vmatpush.bf16.msra.mxu0 0
  %104 = vmatpush.bf16.msra.mxu0 %v70
  %105 = vmatpush.bf16.msra.mxu0 %v66
  %106 = vmatmul.bf16.gmra.mxu0 %v83
  %v107 = vpop.f32.mrf.mxu0
  %v108 = vadd.f32 %v34, %v107
  %v109 = vpop.f32.mrf.mxu0
  %110 = vdwg.mxu0
  %111 = vmatpush.bf16.msra.mxu0 0
  %112 = vmatpush.bf16.msra.mxu0 0
  %113 = vmatpush.bf16.msra.mxu0 0
  %114 = vmatpush.bf16.msra.mxu0 0
  %115 = vmatpush.bf16.msra.mxu0 0
  %116 = vmatpush.bf16.msra.mxu0 0
  %117 = vmatpush.bf16.msra.mxu0 %v71
  %118 = vmatpush.bf16.msra.mxu0 %v67
  %119 = vmatmul.bf16.gmra.mxu0 %v83
  %v120 = vpop.f32.mrf.mxu0
  %v121 = vadd.f32 %v35, %v120
  %v122 = vpop.f32.mrf.mxu0
  %123 = vdwg.mxu0
  %124 = vmatpush.bf16.msra.mxu0 0
  %125 = vmatpush.bf16.msra.mxu0 0
  %126 = vmatpush.bf16.msra.mxu0 0
  %127 = vmatpush.bf16.msra.mxu0 0
  %128 = vmatpush.bf16.msra.mxu0 0
  %129 = vmatpush.bf16.msra.mxu0 0
  %130 = vmatpush.bf16.msra.mxu0 %v72
  %131 = vmatpush.bf16.msra.mxu0 %v68
  %132 = vmatmul.bf16.gmra.mxu0 %v83
  %v133 = vpop.f32.mrf.mxu0
  %v134 = vadd.f32 %v36, %v133
  %v135 = vpop.f32.mrf.mxu0
  %136 = vdwg.mxu0
  %v137 = vld [vmem:[%s4] sm:$0xf]
  %v138 = vld [vmem:[%s4 + $0x4] sm:$0xf]
  %v139 = vld [vmem:[%s4 + $0x8] sm:$0xf]
  %v140 = vld [vmem:[%s4 + $0xc] sm:$0xf]
  %v141 = vld [vmem:[%s4 + $0x10] sm:$0xf]
  %v142 = vld [vmem:[%s4 + $0x14] sm:$0xf]
  %v143 = vld [vmem:[%s4 + $0x18] sm:$0xf]
  %v144 = vld [vmem:[%s4 + $0x1c] sm:$0xf]
  %v145 = vld [vmem:[%s4 + $0x20] sm:$0xf]
  %v146 = vld [vmem:[%s4 + $0x24] sm:$0xf]
  %v147 = vld [vmem:[%s4 + $0x28] sm:$0xf]
  %v148 = vld [vmem:[%s4 + $0x2c] sm:$0xf]
  %v149 = vld [vmem:[%s4 + $0x30] sm:$0xf]
  %v150 = vld [vmem:[%s4 + $0x34] sm:$0xf]
  %v151 = vld [vmem:[%s4 + $0x38] sm:$0xf]
  %v152 = vld [vmem:[%s4 + $0x3c] sm:$0xf]
  %v153 = vld [vmem:[%s4 + $0x40] sm:$0xf]
  %v154 = vld [vmem:[%s4 + $0x44] sm:$0xf]
  %v155 = vld [vmem:[%s4 + $0x48] sm:$0xf]
  %v156 = vld [vmem:[%s4 + $0x4c] sm:$0xf]
  %v157 = vld [vmem:[%s4 + $0x50] sm:$0xf]
  %v158 = vld [vmem:[%s4 + $0x54] sm:$0xf]
  %v159 = vld [vmem:[%s4 + $0x58] sm:$0xf]
  %v160 = vld [vmem:[%s4 + $0x5c] sm:$0xf]
  %v161 = vld [vmem:[%s4 + $0x60] sm:$0xf]
  %v162 = vld [vmem:[%s4 + $0x64] sm:$0xf]
  %v163 = vld [vmem:[%s4 + $0x68] sm:$0xf]
  %v164 = vld [vmem:[%s4 + $0x6c] sm:$0xf]
  %v165 = vld [vmem:[%s4 + $0x70] sm:$0xf]
  %v166 = vld [vmem:[%s4 + $0x74] sm:$0xf]
  %v167 = vld [vmem:[%s4 + $0x78] sm:$0xf]
  %v168 = vld [vmem:[%s4 + $0x7c] sm:$0xf]
  %v169 = vld [vmem:[%s4 + $0x80] sm:$0xf]
  %v170 = vld [vmem:[%s4 + $0x84] sm:$0xf]
  %v171 = vld [vmem:[%s4 + $0x88] sm:$0xf]
  %v172 = vld [vmem:[%s4 + $0x8c] sm:$0xf]
  %v173 = vld [vmem:[%s4 + $0x90] sm:$0xf]
  %v174 = vld [vmem:[%s4 + $0x94] sm:$0xf]
  %v175 = vld [vmem:[%s4 + $0x98] sm:$0xf]
  %v176 = vld [vmem:[%s4 + $0x9c] sm:$0xf]
  %v177 = vld [vmem:[%s4 + $0xa0] sm:$0xf]
  %v178 = vld [vmem:[%s4 + $0xa4] sm:$0xf]
  %v179 = vld [vmem:[%s4 + $0xa8] sm:$0xf]
  %v180 = vld [vmem:[%s4 + $0xac] sm:$0xf]
  %v181 = vld [vmem:[%s4 + $0xb0] sm:$0xf]
  %v182 = vld [vmem:[%s4 + $0xb4] sm:$0xf]
  %v183 = vld [vmem:[%s4 + $0xb8] sm:$0xf]
  %v184 = vld [vmem:[%s4 + $0xbc] sm:$0xf]
  %v185 = vld [vmem:[%s4 + $0xc0] sm:$0xf]
  %v186 = vld [vmem:[%s4 + $0xc4] sm:$0xf]
  %v187 = vld [vmem:[%s4 + $0xc8] sm:$0xf]
  %v188 = vld [vmem:[%s4 + $0xcc] sm:$0xf]
  %v189 = vld [vmem:[%s4 + $0xd0] sm:$0xf]
  %v190 = vld [vmem:[%s4 + $0xd4] sm:$0xf]
  %v191 = vld [vmem:[%s4 + $0xd8] sm:$0xf]
  %v192 = vld [vmem:[%s4 + $0xdc] sm:$0xf]
  %v193 = vld [vmem:[%s4 + $0xe0] sm:$0xf]
  %v194 = vld [vmem:[%s4 + $0xe4] sm:$0xf]
  %v195 = vld [vmem:[%s4 + $0xe8] sm:$0xf]
  %v196 = vld [vmem:[%s4 + $0xec] sm:$0xf]
  %v197 = vld [vmem:[%s4 + $0xf0] sm:$0xf]
  %v198 = vld [vmem:[%s4 + $0xf4] sm:$0xf]
  %v199 = vld [vmem:[%s4 + $0xf8] sm:$0xf]
  %v200 = vld [vmem:[%s4 + $0xfc] sm:$0xf]
  %v201 = vld [vmem:[%s4 + $0x100] sm:$0xf]
  %v202 = vld [vmem:[%s4 + $0x104] sm:$0xf]
  %v203 = vld [vmem:[%s4 + $0x108] sm:$0xf]
  %v204 = vld [vmem:[%s4 + $0x10c] sm:$0xf]
  %v205 = vld [vmem:[%s4 + $0x110] sm:$0xf]
  %v206 = vld [vmem:[%s4 + $0x114] sm:$0xf]
  %v207 = vld [vmem:[%s4 + $0x118] sm:$0xf]
  %v208 = vld [vmem:[%s4 + $0x11c] sm:$0xf]
  %v209 = vld [vmem:[%s4 + $0x120] sm:$0xf]
  %v210 = vld [vmem:[%s4 + $0x124] sm:$0xf]
  %v211 = vld [vmem:[%s4 + $0x128] sm:$0xf]
  %v212 = vld [vmem:[%s4 + $0x12c] sm:$0xf]
  %v213 = vld [vmem:[%s4 + $0x130] sm:$0xf]
  %v214 = vld [vmem:[%s4 + $0x134] sm:$0xf]
  %v215 = vld [vmem:[%s4 + $0x138] sm:$0xf]
  %v216 = vld [vmem:[%s4 + $0x13c] sm:$0xf]
  %v217 = vld [vmem:[%s4 + $0x140] sm:$0xf]
  %v218 = vld [vmem:[%s4 + $0x144] sm:$0xf]
  %v219 = vld [vmem:[%s4 + $0x148] sm:$0xf]
  %v220 = vld [vmem:[%s4 + $0x14c] sm:$0xf]
  %v221 = vld [vmem:[%s4 + $0x150] sm:$0xf]
  %v222 = vld [vmem:[%s4 + $0x154] sm:$0xf]
  %v223 = vld [vmem:[%s4 + $0x158] sm:$0xf]
  %v224 = vld [vmem:[%s4 + $0x15c] sm:$0xf]
  %v225 = vld [vmem:[%s4 + $0x160] sm:$0xf]
  %v226 = vld [vmem:[%s4 + $0x164] sm:$0xf]
  %v227 = vld [vmem:[%s4 + $0x168] sm:$0xf]
  %v228 = vld [vmem:[%s4 + $0x16c] sm:$0xf]
  %v229 = vld [vmem:[%s4 + $0x170] sm:$0xf]
  %v230 = vld [vmem:[%s4 + $0x174] sm:$0xf]
  %v231 = vld [vmem:[%s4 + $0x178] sm:$0xf]
  %v232 = vld [vmem:[%s4 + $0x17c] sm:$0xf]
  %v233 = vld [vmem:[%s4 + $0x180] sm:$0xf]
  %v234 = vld [vmem:[%s4 + $0x184] sm:$0xf]
  %v235 = vld [vmem:[%s4 + $0x188] sm:$0xf]
  %v236 = vld [vmem:[%s4 + $0x18c] sm:$0xf]
  %v237 = vld [vmem:[%s4 + $0x190] sm:$0xf]
  %v238 = vld [vmem:[%s4 + $0x194] sm:$0xf]
  %v239 = vld [vmem:[%s4 + $0x198] sm:$0xf]
  %v240 = vld [vmem:[%s4 + $0x19c] sm:$0xf]
  %v241 = vld [vmem:[%s4 + $0x1a0] sm:$0xf]
  %v242 = vld [vmem:[%s4 + $0x1a4] sm:$0xf]
  %v243 = vld [vmem:[%s4 + $0x1a8] sm:$0xf]
  %v244 = vld [vmem:[%s4 + $0x1ac] sm:$0xf]
  %v245 = vld [vmem:[%s4 + $0x1b0] sm:$0xf]
  %v246 = vld [vmem:[%s4 + $0x1b4] sm:$0xf]
  %v247 = vld [vmem:[%s4 + $0x1b8] sm:$0xf]
  %v248 = vld [vmem:[%s4 + $0x1bc] sm:$0xf]
  %v249 = vld [vmem:[%s4 + $0x1c0] sm:$0xf]
  %v250 = vld [vmem:[%s4 + $0x1c4] sm:$0xf]
  %v251 = vld [vmem:[%s4 + $0x1c8] sm:$0xf]
  %v252 = vld [vmem:[%s4 + $0x1cc] sm:$0xf]
  %v253 = vld [vmem:[%s4 + $0x1d0] sm:$0xf]
  %v254 = vld [vmem:[%s4 + $0x1d4] sm:$0xf]
  %v255 = vld [vmem:[%s4 + $0x1d8] sm:$0xf]
  %v256 = vld [vmem:[%s4 + $0x1dc] sm:$0xf]
  %v257 = vld [vmem:[%s4 + $0x1e0] sm:$0xf]
  %v258 = vld [vmem:[%s4 + $0x1e4] sm:$0xf]
  %v259 = vld [vmem:[%s4 + $0x1e8] sm:$0xf]
  %v260 = vld [vmem:[%s4 + $0x1ec] sm:$0xf]
  %v261 = vld [vmem:[%s4 + $0x1f0] sm:$0xf]
  %v262 = vld [vmem:[%s4 + $0x1f4] sm:$0xf]
  %v263 = vld [vmem:[%s4 + $0x1f8] sm:$0xf]
  %v264 = vld [vmem:[%s4 + $0x1fc] sm:$0xf]
  %v265 = vunpack.c.l.bf16 %v137
  %v266 = vunpack.c.l.bf16 %v138
  %v267 = vunpack.c.l.bf16 %v139
  %v268 = vunpack.c.l.bf16 %v140
  %v269 = vunpack.c.l.bf16 %v141
  %v270 = vunpack.c.l.bf16 %v142
  %v271 = vunpack.c.l.bf16 %v143
  %v272 = vunpack.c.l.bf16 %v144
  %v273 = vunpack.c.l.bf16 %v145
  %v274 = vunpack.c.l.bf16 %v146
  %v275 = vunpack.c.l.bf16 %v147
  %v276 = vunpack.c.l.bf16 %v148
  %v277 = vunpack.c.l.bf16 %v149
  %v278 = vunpack.c.l.bf16 %v150
  %v279 = vunpack.c.l.bf16 %v151
  %v280 = vunpack.c.l.bf16 %v152
  %v281 = vunpack.c.l.bf16 %v153
  %v282 = vunpack.c.l.bf16 %v154
  %v283 = vunpack.c.l.bf16 %v155
  %v284 = vunpack.c.l.bf16 %v156
  %v285 = vunpack.c.l.bf16 %v157
  %v286 = vunpack.c.l.bf16 %v158
  %v287 = vunpack.c.l.bf16 %v159
  %v288 = vunpack.c.l.bf16 %v160
  %v289 = vunpack.c.l.bf16 %v161
  %v290 = vunpack.c.l.bf16 %v162
  %v291 = vunpack.c.l.bf16 %v163
  %v292 = vunpack.c.l.bf16 %v164
  %v293 = vunpack.c.l.bf16 %v165
  %v294 = vunpack.c.l.bf16 %v166
  %v295 = vunpack.c.l.bf16 %v167
  %v296 = vunpack.c.l.bf16 %v168
  %v297 = vunpack.c.l.bf16 %v169
  %v298 = vunpack.c.l.bf16 %v170
  %v299 = vunpack.c.l.bf16 %v171
  %v300 = vunpack.c.l.bf16 %v172
  %v301 = vunpack.c.l.bf16 %v173
  %v302 = vunpack.c.l.bf16 %v174
  %v303 = vunpack.c.l.bf16 %v175
  %v304 = vunpack.c.l.bf16 %v176
  %v305 = vunpack.c.l.bf16 %v177
  %v306 = vunpack.c.l.bf16 %v178
  %v307 = vunpack.c.l.bf16 %v179
  %v308 = vunpack.c.l.bf16 %v180
  %v309 = vunpack.c.l.bf16 %v181
  %v310 = vunpack.c.l.bf16 %v182
  %v311 = vunpack.c.l.bf16 %v183
  %v312 = vunpack.c.l.bf16 %v184
  %v313 = vunpack.c.l.bf16 %v185
  %v314 = vunpack.c.l.bf16 %v186
  %v315 = vunpack.c.l.bf16 %v187
  %v316 = vunpack.c.l.bf16 %v188
  %v317 = vunpack.c.l.bf16 %v189
  %v318 = vunpack.c.l.bf16 %v190
  %v319 = vunpack.c.l.bf16 %v191
  %v320 = vunpack.c.l.bf16 %v192
  %v321 = vunpack.c.l.bf16 %v193
  %v322 = vunpack.c.l.bf16 %v194
  %v323 = vunpack.c.l.bf16 %v195
  %v324 = vunpack.c.l.bf16 %v196
  %v325 = vunpack.c.l.bf16 %v197
  %v326 = vunpack.c.l.bf16 %v198
  %v327 = vunpack.c.l.bf16 %v199
  %v328 = vunpack.c.l.bf16 %v200
  %v329 = vunpack.c.l.bf16 %v201
  %v330 = vunpack.c.l.bf16 %v202
  %v331 = vunpack.c.l.bf16 %v203
  %v332 = vunpack.c.l.bf16 %v204
  %v333 = vunpack.c.l.bf16 %v205
  %v334 = vunpack.c.l.bf16 %v206
  %v335 = vunpack.c.l.bf16 %v207
  %v336 = vunpack.c.l.bf16 %v208
  %v337 = vunpack.c.l.bf16 %v209
  %v338 = vunpack.c.l.bf16 %v210
  %v339 = vunpack.c.l.bf16 %v211
  %v340 = vunpack.c.l.bf16 %v212
  %v341 = vunpack.c.l.bf16 %v213
  %v342 = vunpack.c.l.bf16 %v214
  %v343 = vunpack.c.l.bf16 %v215
  %v344 = vunpack.c.l.bf16 %v216
  %v345 = vunpack.c.l.bf16 %v217
  %v346 = vunpack.c.l.bf16 %v218
  %v347 = vunpack.c.l.bf16 %v219
  %v348 = vunpack.c.l.bf16 %v220
  %v349 = vunpack.c.l.bf16 %v221
  %v350 = vunpack.c.l.bf16 %v222
  %v351 = vunpack.c.l.bf16 %v223
  %v352 = vunpack.c.l.bf16 %v224
  %v353 = vunpack.c.l.bf16 %v225
  %v354 = vunpack.c.l.bf16 %v226
  %v355 = vunpack.c.l.bf16 %v227
  %v356 = vunpack.c.l.bf16 %v228
  %v357 = vunpack.c.l.bf16 %v229
  %v358 = vunpack.c.l.bf16 %v230
  %v359 = vunpack.c.l.bf16 %v231
  %v360 = vunpack.c.l.bf16 %v232
  %v361 = vunpack.c.l.bf16 %v233
  %v362 = vunpack.c.l.bf16 %v234
  %v363 = vunpack.c.l.bf16 %v235
  %v364 = vunpack.c.l.bf16 %v236
  %v365 = vunpack.c.l.bf16 %v237
  %v366 = vunpack.c.l.bf16 %v238
  %v367 = vunpack.c.l.bf16 %v239
  %v368 = vunpack.c.l.bf16 %v240
  %v369 = vunpack.c.l.bf16 %v241
  %v370 = vunpack.c.l.bf16 %v242
  %v371 = vunpack.c.l.bf16 %v243
  %v372 = vunpack.c.l.bf16 %v244
  %v373 = vunpack.c.l.bf16 %v245
  %v374 = vunpack.c.l.bf16 %v246
  %v375 = vunpack.c.l.bf16 %v247
  %v376 = vunpack.c.l.bf16 %v248
  %v377 = vunpack.c.l.bf16 %v249
  %v378 = vunpack.c.l.bf16 %v250
  %v379 = vunpack.c.l.bf16 %v251
  %v380 = vunpack.c.l.bf16 %v252
  %v381 = vunpack.c.l.bf16 %v253
  %v382 = vunpack.c.l.bf16 %v254
  %v383 = vunpack.c.l.bf16 %v255
  %v384 = vunpack.c.l.bf16 %v256
  %v385 = vunpack.c.l.bf16 %v257
  %v386 = vunpack.c.l.bf16 %v258
  %v387 = vunpack.c.l.bf16 %v259
  %v388 = vunpack.c.l.bf16 %v260
  %v389 = vunpack.c.l.bf16 %v261
  %v390 = vunpack.c.l.bf16 %v262
  %v391 = vunpack.c.l.bf16 %v263
  %v392 = vunpack.c.l.bf16 %v264
  %v394 = vrot.slane %v134, 1
  %v395 = vrot.slane %v134, 2
  %v396 = vrot.slane %v134, 3
  %v397 = vrot.slane %v134, 4
  %v398 = vrot.slane %v134, 5
  %v399 = vrot.slane %v134, 6
  %v400 = vrot.slane %v134, 7
  %v401 = vperm.slane %v134, 0
  %v402 = vperm.slane %v394, 0
  %v403 = vperm.slane %v395, 0
  %v404 = vperm.slane %v396, 0
  %v405 = vperm.slane %v397, 0
  %v406 = vperm.slane %v398, 0
  %v407 = vperm.slane %v399, 0
  %v408 = vperm.slane %v400, 0
  %v417 = vmul.f32 %v265, %v401
  %v418 = vmul.f32 %v266, %v401
  %v419 = vmul.f32 %v267, %v401
  %v420 = vmul.f32 %v268, %v401
  %v421 = vmul.f32 %v269, %v401
  %v422 = vmul.f32 %v270, %v401
  %v423 = vmul.f32 %v271, %v401
  %v424 = vmul.f32 %v272, %v401
  %v425 = vmul.f32 %v273, %v401
  %v426 = vmul.f32 %v274, %v401
  %v427 = vmul.f32 %v275, %v401
  %v428 = vmul.f32 %v276, %v401
  %v429 = vmul.f32 %v277, %v401
  %v430 = vmul.f32 %v278, %v401
  %v431 = vmul.f32 %v279, %v401
  %v432 = vmul.f32 %v280, %v401
  %v433 = vmul.f32 %v281, %v402
  %v434 = vmul.f32 %v282, %v402
  %v435 = vmul.f32 %v283, %v402
  %v436 = vmul.f32 %v284, %v402
  %v437 = vmul.f32 %v285, %v402
  %v438 = vmul.f32 %v286, %v402
  %v439 = vmul.f32 %v287, %v402
  %v440 = vmul.f32 %v288, %v402
  %v441 = vmul.f32 %v289, %v402
  %v442 = vmul.f32 %v290, %v402
  %v443 = vmul.f32 %v291, %v402
  %v444 = vmul.f32 %v292, %v402
  %v445 = vmul.f32 %v293, %v402
  %v446 = vmul.f32 %v294, %v402
  %v447 = vmul.f32 %v295, %v402
  %v448 = vmul.f32 %v296, %v402
  %v449 = vmul.f32 %v297, %v403
  %v450 = vmul.f32 %v298, %v403
  %v451 = vmul.f32 %v299, %v403
  %v452 = vmul.f32 %v300, %v403
  %v453 = vmul.f32 %v301, %v403
  %v454 = vmul.f32 %v302, %v403
  %v455 = vmul.f32 %v303, %v403
  %v456 = vmul.f32 %v304, %v403
  %v457 = vmul.f32 %v305, %v403
  %v458 = vmul.f32 %v306, %v403
  %v459 = vmul.f32 %v307, %v403
  %v460 = vmul.f32 %v308, %v403
  %v461 = vmul.f32 %v309, %v403
  %v462 = vmul.f32 %v310, %v403
  %v463 = vmul.f32 %v311, %v403
  %v464 = vmul.f32 %v312, %v403
  %v465 = vmul.f32 %v313, %v404
  %v466 = vmul.f32 %v314, %v404
  %v467 = vmul.f32 %v315, %v404
  %v468 = vmul.f32 %v316, %v404
  %v469 = vmul.f32 %v317, %v404
  %v470 = vmul.f32 %v318, %v404
  %v471 = vmul.f32 %v319, %v404
  %v472 = vmul.f32 %v320, %v404
  %v473 = vmul.f32 %v321, %v404
  %v474 = vmul.f32 %v322, %v404
  %v475 = vmul.f32 %v323, %v404
  %v476 = vmul.f32 %v324, %v404
  %v477 = vmul.f32 %v325, %v404
  %v478 = vmul.f32 %v326, %v404
  %v479 = vmul.f32 %v327, %v404
  %v480 = vmul.f32 %v328, %v404
  %v481 = vmul.f32 %v329, %v405
  %v482 = vmul.f32 %v330, %v405
  %v483 = vmul.f32 %v331, %v405
  %v484 = vmul.f32 %v332, %v405
  %v485 = vmul.f32 %v333, %v405
  %v486 = vmul.f32 %v334, %v405
  %v487 = vmul.f32 %v335, %v405
  %v488 = vmul.f32 %v336, %v405
  %v489 = vmul.f32 %v337, %v405
  %v490 = vmul.f32 %v338, %v405
  %v491 = vmul.f32 %v339, %v405
  %v492 = vmul.f32 %v340, %v405
  %v493 = vmul.f32 %v341, %v405
  %v494 = vmul.f32 %v342, %v405
  %v495 = vmul.f32 %v343, %v405
  %v496 = vmul.f32 %v344, %v405
  %v497 = vmul.f32 %v345, %v406
  %v498 = vmul.f32 %v346, %v406
  %v499 = vmul.f32 %v347, %v406
  %v500 = vmul.f32 %v348, %v406
  %v501 = vmul.f32 %v349, %v406
  %v502 = vmul.f32 %v350, %v406
  %v503 = vmul.f32 %v351, %v406
  %v504 = vmul.f32 %v352, %v406
  %v505 = vmul.f32 %v353, %v406
  %v506 = vmul.f32 %v354, %v406
  %v507 = vmul.f32 %v355, %v406
  %v508 = vmul.f32 %v356, %v406
  %v509 = vmul.f32 %v357, %v406
  %v510 = vmul.f32 %v358, %v406
  %v511 = vmul.f32 %v359, %v406
  %v512 = vmul.f32 %v360, %v406
  %v513 = vmul.f32 %v361, %v407
  %v514 = vmul.f32 %v362, %v407
  %v515 = vmul.f32 %v363, %v407
  %v516 = vmul.f32 %v364, %v407
  %v517 = vmul.f32 %v365, %v407
  %v518 = vmul.f32 %v366, %v407
  %v519 = vmul.f32 %v367, %v407
  %v520 = vmul.f32 %v368, %v407
  %v521 = vmul.f32 %v369, %v407
  %v522 = vmul.f32 %v370, %v407
  %v523 = vmul.f32 %v371, %v407
  %v524 = vmul.f32 %v372, %v407
  %v525 = vmul.f32 %v373, %v407
  %v526 = vmul.f32 %v374, %v407
  %v527 = vmul.f32 %v375, %v407
  %v528 = vmul.f32 %v376, %v407
  %v529 = vmul.f32 %v377, %v408
  %v530 = vmul.f32 %v378, %v408
  %v531 = vmul.f32 %v379, %v408
  %v532 = vmul.f32 %v380, %v408
  %v533 = vmul.f32 %v381, %v408
  %v534 = vmul.f32 %v382, %v408
  %v535 = vmul.f32 %v383, %v408
  %v536 = vmul.f32 %v384, %v408
  %v537 = vmul.f32 %v385, %v408
  %v538 = vmul.f32 %v386, %v408
  %v539 = vmul.f32 %v387, %v408
  %v540 = vmul.f32 %v388, %v408
  %v541 = vmul.f32 %v389, %v408
  %v542 = vmul.f32 %v390, %v408
  %v543 = vmul.f32 %v391, %v408
  %v544 = vmul.f32 %v392, %v408
  %v545 = vsel %vm81, %v417, 0.0
  %546 = vadd.xlane.f32.xlu0 %v545
  %v547 = vpop.xlane.xlu0 %546
  %v548 = vsel %vm81, %v418, 0.0
  %549 = vadd.xlane.f32.xlu0 %v548
  %v550 = vpop.xlane.xlu0 %549
  %v551 = vsel %vm81, %v419, 0.0
  %552 = vadd.xlane.f32.xlu0 %v551
  %v553 = vpop.xlane.xlu0 %552
  %v554 = vsel %vm81, %v420, 0.0
  %555 = vadd.xlane.f32.xlu0 %v554
  %v556 = vpop.xlane.xlu0 %555
  %v557 = vsel %vm81, %v421, 0.0
  %558 = vadd.xlane.f32.xlu0 %v557
  %v559 = vpop.xlane.xlu0 %558
  %v560 = vsel %vm81, %v422, 0.0
  %561 = vadd.xlane.f32.xlu0 %v560
  %v562 = vpop.xlane.xlu0 %561
  %v563 = vsel %vm81, %v423, 0.0
  %564 = vadd.xlane.f32.xlu0 %v563
  %v565 = vpop.xlane.xlu0 %564
  %v566 = vsel %vm81, %v424, 0.0
  %567 = vadd.xlane.f32.xlu0 %v566
  %v568 = vpop.xlane.xlu0 %567
  %v569 = vsel %vm81, %v425, 0.0
  %570 = vadd.xlane.f32.xlu0 %v569
  %v571 = vpop.xlane.xlu0 %570
  %v572 = vsel %vm81, %v426, 0.0
  %573 = vadd.xlane.f32.xlu0 %v572
  %v574 = vpop.xlane.xlu0 %573
  %v575 = vsel %vm81, %v427, 0.0
  %576 = vadd.xlane.f32.xlu0 %v575
  %v577 = vpop.xlane.xlu0 %576
  %v578 = vsel %vm81, %v428, 0.0
  %579 = vadd.xlane.f32.xlu0 %v578
  %v580 = vpop.xlane.xlu0 %579
  %v581 = vsel %vm81, %v429, 0.0
  %582 = vadd.xlane.f32.xlu0 %v581
  %v583 = vpop.xlane.xlu0 %582
  %v584 = vsel %vm81, %v430, 0.0
  %585 = vadd.xlane.f32.xlu0 %v584
  %v586 = vpop.xlane.xlu0 %585
  %v587 = vsel %vm81, %v431, 0.0
  %588 = vadd.xlane.f32.xlu0 %v587
  %v589 = vpop.xlane.xlu0 %588
  %v590 = vsel %vm81, %v432, 0.0
  %591 = vadd.xlane.f32.xlu0 %v590
  %v592 = vpop.xlane.xlu0 %591
  %v593 = vsel %vm81, %v433, 0.0
  %594 = vadd.xlane.f32.xlu0 %v593
  %v595 = vpop.xlane.xlu0 %594
  %v596 = vsel %vm81, %v434, 0.0
  %597 = vadd.xlane.f32.xlu0 %v596
  %v598 = vpop.xlane.xlu0 %597
  %v599 = vsel %vm81, %v435, 0.0
  %600 = vadd.xlane.f32.xlu0 %v599
  %v601 = vpop.xlane.xlu0 %600
  %v602 = vsel %vm81, %v436, 0.0
  %603 = vadd.xlane.f32.xlu0 %v602
  %v604 = vpop.xlane.xlu0 %603
  %v605 = vsel %vm81, %v437, 0.0
  %606 = vadd.xlane.f32.xlu0 %v605
  %v607 = vpop.xlane.xlu0 %606
  %v608 = vsel %vm81, %v438, 0.0
  %609 = vadd.xlane.f32.xlu0 %v608
  %v610 = vpop.xlane.xlu0 %609
  %v611 = vsel %vm81, %v439, 0.0
  %612 = vadd.xlane.f32.xlu0 %v611
  %v613 = vpop.xlane.xlu0 %612
  %v614 = vsel %vm81, %v440, 0.0
  %615 = vadd.xlane.f32.xlu0 %v614
  %v616 = vpop.xlane.xlu0 %615
  %v617 = vsel %vm81, %v441, 0.0
  %618 = vadd.xlane.f32.xlu0 %v617
  %v619 = vpop.xlane.xlu0 %618
  %v620 = vsel %vm81, %v442, 0.0
  %621 = vadd.xlane.f32.xlu0 %v620
  %v622 = vpop.xlane.xlu0 %621
  %v623 = vsel %vm81, %v443, 0.0
  %624 = vadd.xlane.f32.xlu0 %v623
  %v625 = vpop.xlane.xlu0 %624
  %v626 = vsel %vm81, %v444, 0.0
  %627 = vadd.xlane.f32.xlu0 %v626
  %v628 = vpop.xlane.xlu0 %627
  %v629 = vsel %vm81, %v445, 0.0
  %630 = vadd.xlane.f32.xlu0 %v629
  %v631 = vpop.xlane.xlu0 %630
  %v632 = vsel %vm81, %v446, 0.0
  %633 = vadd.xlane.f32.xlu0 %v632
  %v634 = vpop.xlane.xlu0 %633
  %v635 = vsel %vm81, %v447, 0.0
  %636 = vadd.xlane.f32.xlu0 %v635
  %v637 = vpop.xlane.xlu0 %636
  %v638 = vsel %vm81, %v448, 0.0
  %639 = vadd.xlane.f32.xlu0 %v638
  %v640 = vpop.xlane.xlu0 %639
  %v641 = vsel %vm81, %v449, 0.0
  %642 = vadd.xlane.f32.xlu0 %v641
  %v643 = vpop.xlane.xlu0 %642
  %v644 = vsel %vm81, %v450, 0.0
  %645 = vadd.xlane.f32.xlu0 %v644
  %v646 = vpop.xlane.xlu0 %645
  %v647 = vsel %vm81, %v451, 0.0
  %648 = vadd.xlane.f32.xlu0 %v647
  %v649 = vpop.xlane.xlu0 %648
  %v650 = vsel %vm81, %v452, 0.0
  %651 = vadd.xlane.f32.xlu0 %v650
  %v652 = vpop.xlane.xlu0 %651
  %v653 = vsel %vm81, %v453, 0.0
  %654 = vadd.xlane.f32.xlu0 %v653
  %v655 = vpop.xlane.xlu0 %654
  %v656 = vsel %vm81, %v454, 0.0
  %657 = vadd.xlane.f32.xlu0 %v656
  %v658 = vpop.xlane.xlu0 %657
  %v659 = vsel %vm81, %v455, 0.0
  %660 = vadd.xlane.f32.xlu0 %v659
  %v661 = vpop.xlane.xlu0 %660
  %v662 = vsel %vm81, %v456, 0.0
  %663 = vadd.xlane.f32.xlu0 %v662
  %v664 = vpop.xlane.xlu0 %663
  %v665 = vsel %vm81, %v457, 0.0
  %666 = vadd.xlane.f32.xlu0 %v665
  %v667 = vpop.xlane.xlu0 %666
  %v668 = vsel %vm81, %v458, 0.0
  %669 = vadd.xlane.f32.xlu0 %v668
  %v670 = vpop.xlane.xlu0 %669
  %v671 = vsel %vm81, %v459, 0.0
  %672 = vadd.xlane.f32.xlu0 %v671
  %v673 = vpop.xlane.xlu0 %672
  %v674 = vsel %vm81, %v460, 0.0
  %675 = vadd.xlane.f32.xlu0 %v674
  %v676 = vpop.xlane.xlu0 %675
  %v677 = vsel %vm81, %v461, 0.0
  %678 = vadd.xlane.f32.xlu0 %v677
  %v679 = vpop.xlane.xlu0 %678
  %v680 = vsel %vm81, %v462, 0.0
  %681 = vadd.xlane.f32.xlu0 %v680
  %v682 = vpop.xlane.xlu0 %681
  %v683 = vsel %vm81, %v463, 0.0
  %684 = vadd.xlane.f32.xlu0 %v683
  %v685 = vpop.xlane.xlu0 %684
  %v686 = vsel %vm81, %v464, 0.0
  %687 = vadd.xlane.f32.xlu0 %v686
  %v688 = vpop.xlane.xlu0 %687
  %v689 = vsel %vm81, %v465, 0.0
  %690 = vadd.xlane.f32.xlu0 %v689
  %v691 = vpop.xlane.xlu0 %690
  %v692 = vsel %vm81, %v466, 0.0
  %693 = vadd.xlane.f32.xlu0 %v692
  %v694 = vpop.xlane.xlu0 %693
  %v695 = vsel %vm81, %v467, 0.0
  %696 = vadd.xlane.f32.xlu0 %v695
  %v697 = vpop.xlane.xlu0 %696
  %v698 = vsel %vm81, %v468, 0.0
  %699 = vadd.xlane.f32.xlu0 %v698
  %v700 = vpop.xlane.xlu0 %699
  %v701 = vsel %vm81, %v469, 0.0
  %702 = vadd.xlane.f32.xlu0 %v701
  %v703 = vpop.xlane.xlu0 %702
  %v704 = vsel %vm81, %v470, 0.0
  %705 = vadd.xlane.f32.xlu0 %v704
  %v706 = vpop.xlane.xlu0 %705
  %v707 = vsel %vm81, %v471, 0.0
  %708 = vadd.xlane.f32.xlu0 %v707
  %v709 = vpop.xlane.xlu0 %708
  %v710 = vsel %vm81, %v472, 0.0
  %711 = vadd.xlane.f32.xlu0 %v710
  %v712 = vpop.xlane.xlu0 %711
  %v713 = vsel %vm81, %v473, 0.0
  %714 = vadd.xlane.f32.xlu0 %v713
  %v715 = vpop.xlane.xlu0 %714
  %v716 = vsel %vm81, %v474, 0.0
  %717 = vadd.xlane.f32.xlu0 %v716
  %v718 = vpop.xlane.xlu0 %717
  %v719 = vsel %vm81, %v475, 0.0
  %720 = vadd.xlane.f32.xlu0 %v719
  %v721 = vpop.xlane.xlu0 %720
  %v722 = vsel %vm81, %v476, 0.0
  %723 = vadd.xlane.f32.xlu0 %v722
  %v724 = vpop.xlane.xlu0 %723
  %v725 = vsel %vm81, %v477, 0.0
  %726 = vadd.xlane.f32.xlu0 %v725
  %v727 = vpop.xlane.xlu0 %726
  %v728 = vsel %vm81, %v478, 0.0
  %729 = vadd.xlane.f32.xlu0 %v728
  %v730 = vpop.xlane.xlu0 %729
  %v731 = vsel %vm81, %v479, 0.0
  %732 = vadd.xlane.f32.xlu0 %v731
  %v733 = vpop.xlane.xlu0 %732
  %v734 = vsel %vm81, %v480, 0.0
  %735 = vadd.xlane.f32.xlu0 %v734
  %v736 = vpop.xlane.xlu0 %735
  %v737 = vsel %vm81, %v481, 0.0
  %738 = vadd.xlane.f32.xlu0 %v737
  %v739 = vpop.xlane.xlu0 %738
  %v740 = vsel %vm81, %v482, 0.0
  %741 = vadd.xlane.f32.xlu0 %v740
  %v742 = vpop.xlane.xlu0 %741
  %v743 = vsel %vm81, %v483, 0.0
  %744 = vadd.xlane.f32.xlu0 %v743
  %v745 = vpop.xlane.xlu0 %744
  %v746 = vsel %vm81, %v484, 0.0
  %747 = vadd.xlane.f32.xlu0 %v746
  %v748 = vpop.xlane.xlu0 %747
  %v749 = vsel %vm81, %v485, 0.0
  %750 = vadd.xlane.f32.xlu0 %v749
  %v751 = vpop.xlane.xlu0 %750
  %v752 = vsel %vm81, %v486, 0.0
  %753 = vadd.xlane.f32.xlu0 %v752
  %v754 = vpop.xlane.xlu0 %753
  %v755 = vsel %vm81, %v487, 0.0
  %756 = vadd.xlane.f32.xlu0 %v755
  %v757 = vpop.xlane.xlu0 %756
  %v758 = vsel %vm81, %v488, 0.0
  %759 = vadd.xlane.f32.xlu0 %v758
  %v760 = vpop.xlane.xlu0 %759
  %v761 = vsel %vm81, %v489, 0.0
  %762 = vadd.xlane.f32.xlu0 %v761
  %v763 = vpop.xlane.xlu0 %762
  %v764 = vsel %vm81, %v490, 0.0
  %765 = vadd.xlane.f32.xlu0 %v764
  %v766 = vpop.xlane.xlu0 %765
  %v767 = vsel %vm81, %v491, 0.0
  %768 = vadd.xlane.f32.xlu0 %v767
  %v769 = vpop.xlane.xlu0 %768
  %v770 = vsel %vm81, %v492, 0.0
  %771 = vadd.xlane.f32.xlu0 %v770
  %v772 = vpop.xlane.xlu0 %771
  %v773 = vsel %vm81, %v493, 0.0
  %774 = vadd.xlane.f32.xlu0 %v773
  %v775 = vpop.xlane.xlu0 %774
  %v776 = vsel %vm81, %v494, 0.0
  %777 = vadd.xlane.f32.xlu0 %v776
  %v778 = vpop.xlane.xlu0 %777
  %v779 = vsel %vm81, %v495, 0.0
  %780 = vadd.xlane.f32.xlu0 %v779
  %v781 = vpop.xlane.xlu0 %780
  %v782 = vsel %vm81, %v496, 0.0
  %783 = vadd.xlane.f32.xlu0 %v782
  %v784 = vpop.xlane.xlu0 %783
  %v785 = vsel %vm81, %v497, 0.0
  %786 = vadd.xlane.f32.xlu0 %v785
  %v787 = vpop.xlane.xlu0 %786
  %v788 = vsel %vm81, %v498, 0.0
  %789 = vadd.xlane.f32.xlu0 %v788
  %v790 = vpop.xlane.xlu0 %789
  %v791 = vsel %vm81, %v499, 0.0
  %792 = vadd.xlane.f32.xlu0 %v791
  %v793 = vpop.xlane.xlu0 %792
  %v794 = vsel %vm81, %v500, 0.0
  %795 = vadd.xlane.f32.xlu0 %v794
  %v796 = vpop.xlane.xlu0 %795
  %v797 = vsel %vm81, %v501, 0.0
  %798 = vadd.xlane.f32.xlu0 %v797
  %v799 = vpop.xlane.xlu0 %798
  %v800 = vsel %vm81, %v502, 0.0
  %801 = vadd.xlane.f32.xlu0 %v800
  %v802 = vpop.xlane.xlu0 %801
  %v803 = vsel %vm81, %v503, 0.0
  %804 = vadd.xlane.f32.xlu0 %v803
  %v805 = vpop.xlane.xlu0 %804
  %v806 = vsel %vm81, %v504, 0.0
  %807 = vadd.xlane.f32.xlu0 %v806
  %v808 = vpop.xlane.xlu0 %807
  %v809 = vsel %vm81, %v505, 0.0
  %810 = vadd.xlane.f32.xlu0 %v809
  %v811 = vpop.xlane.xlu0 %810
  %v812 = vsel %vm81, %v506, 0.0
  %813 = vadd.xlane.f32.xlu0 %v812
  %v814 = vpop.xlane.xlu0 %813
  %v815 = vsel %vm81, %v507, 0.0
  %816 = vadd.xlane.f32.xlu0 %v815
  %v817 = vpop.xlane.xlu0 %816
  %v818 = vsel %vm81, %v508, 0.0
  %819 = vadd.xlane.f32.xlu0 %v818
  %v820 = vpop.xlane.xlu0 %819
  %v821 = vsel %vm81, %v509, 0.0
  %822 = vadd.xlane.f32.xlu0 %v821
  %v823 = vpop.xlane.xlu0 %822
  %v824 = vsel %vm81, %v510, 0.0
  %825 = vadd.xlane.f32.xlu0 %v824
  %v826 = vpop.xlane.xlu0 %825
  %v827 = vsel %vm81, %v511, 0.0
  %828 = vadd.xlane.f32.xlu0 %v827
  %v829 = vpop.xlane.xlu0 %828
  %v830 = vsel %vm81, %v512, 0.0
  %831 = vadd.xlane.f32.xlu0 %v830
  %v832 = vpop.xlane.xlu0 %831
  %v833 = vsel %vm81, %v513, 0.0
  %834 = vadd.xlane.f32.xlu0 %v833
  %v835 = vpop.xlane.xlu0 %834
  %v836 = vsel %vm81, %v514, 0.0
  %837 = vadd.xlane.f32.xlu0 %v836
  %v838 = vpop.xlane.xlu0 %837
  %v839 = vsel %vm81, %v515, 0.0
  %840 = vadd.xlane.f32.xlu0 %v839
  %v841 = vpop.xlane.xlu0 %840
  %v842 = vsel %vm81, %v516, 0.0
  %843 = vadd.xlane.f32.xlu0 %v842
  %v844 = vpop.xlane.xlu0 %843
  %v845 = vsel %vm81, %v517, 0.0
  %846 = vadd.xlane.f32.xlu0 %v845
  %v847 = vpop.xlane.xlu0 %846
  %v848 = vsel %vm81, %v518, 0.0
  %849 = vadd.xlane.f32.xlu0 %v848
  %v850 = vpop.xlane.xlu0 %849
  %v851 = vsel %vm81, %v519, 0.0
  %852 = vadd.xlane.f32.xlu0 %v851
  %v853 = vpop.xlane.xlu0 %852
  %v854 = vsel %vm81, %v520, 0.0
  %855 = vadd.xlane.f32.xlu0 %v854
  %v856 = vpop.xlane.xlu0 %855
  %v857 = vsel %vm81, %v521, 0.0
  %858 = vadd.xlane.f32.xlu0 %v857
  %v859 = vpop.xlane.xlu0 %858
  %v860 = vsel %vm81, %v522, 0.0
  %861 = vadd.xlane.f32.xlu0 %v860
  %v862 = vpop.xlane.xlu0 %861
  %v863 = vsel %vm81, %v523, 0.0
  %864 = vadd.xlane.f32.xlu0 %v863
  %v865 = vpop.xlane.xlu0 %864
  %v866 = vsel %vm81, %v524, 0.0
  %867 = vadd.xlane.f32.xlu0 %v866
  %v868 = vpop.xlane.xlu0 %867
  %v869 = vsel %vm81, %v525, 0.0
  %870 = vadd.xlane.f32.xlu0 %v869
  %v871 = vpop.xlane.xlu0 %870
  %v872 = vsel %vm81, %v526, 0.0
  %873 = vadd.xlane.f32.xlu0 %v872
  %v874 = vpop.xlane.xlu0 %873
  %v875 = vsel %vm81, %v527, 0.0
  %876 = vadd.xlane.f32.xlu0 %v875
  %v877 = vpop.xlane.xlu0 %876
  %v878 = vsel %vm81, %v528, 0.0
  %879 = vadd.xlane.f32.xlu0 %v878
  %v880 = vpop.xlane.xlu0 %879
  %v881 = vsel %vm81, %v529, 0.0
  %882 = vadd.xlane.f32.xlu0 %v881
  %v883 = vpop.xlane.xlu0 %882
  %v884 = vsel %vm81, %v530, 0.0
  %885 = vadd.xlane.f32.xlu0 %v884
  %v886 = vpop.xlane.xlu0 %885
  %v887 = vsel %vm81, %v531, 0.0
  %888 = vadd.xlane.f32.xlu0 %v887
  %v889 = vpop.xlane.xlu0 %888
  %v890 = vsel %vm81, %v532, 0.0
  %891 = vadd.xlane.f32.xlu0 %v890
  %v892 = vpop.xlane.xlu0 %891
  %v893 = vsel %vm81, %v533, 0.0
  %894 = vadd.xlane.f32.xlu0 %v893
  %v895 = vpop.xlane.xlu0 %894
  %v896 = vsel %vm81, %v534, 0.0
  %897 = vadd.xlane.f32.xlu0 %v896
  %v898 = vpop.xlane.xlu0 %897
  %v899 = vsel %vm81, %v535, 0.0
  %900 = vadd.xlane.f32.xlu0 %v899
  %v901 = vpop.xlane.xlu0 %900
  %v902 = vsel %vm81, %v536, 0.0
  %903 = vadd.xlane.f32.xlu0 %v902
  %v904 = vpop.xlane.xlu0 %903
  %v905 = vsel %vm81, %v537, 0.0
  %906 = vadd.xlane.f32.xlu0 %v905
  %v907 = vpop.xlane.xlu0 %906
  %v908 = vsel %vm81, %v538, 0.0
  %909 = vadd.xlane.f32.xlu0 %v908
  %v910 = vpop.xlane.xlu0 %909
  %v911 = vsel %vm81, %v539, 0.0
  %912 = vadd.xlane.f32.xlu0 %v911
  %v913 = vpop.xlane.xlu0 %912
  %v914 = vsel %vm81, %v540, 0.0
  %915 = vadd.xlane.f32.xlu0 %v914
  %v916 = vpop.xlane.xlu0 %915
  %v917 = vsel %vm81, %v541, 0.0
  %918 = vadd.xlane.f32.xlu0 %v917
  %v919 = vpop.xlane.xlu0 %918
  %v920 = vsel %vm81, %v542, 0.0
  %921 = vadd.xlane.f32.xlu0 %v920
  %v922 = vpop.xlane.xlu0 %921
  %v923 = vsel %vm81, %v543, 0.0
  %924 = vadd.xlane.f32.xlu0 %v923
  %v925 = vpop.xlane.xlu0 %924
  %v926 = vsel %vm81, %v544, 0.0
  %927 = vadd.xlane.f32.xlu0 %v926
  %v928 = vpop.xlane.xlu0 %927
  %v1057 = vlaneseq
  %v1058 = vand.u32 %v1057, 127
  %v1059 = vperm.slane %v547, %v1058
  %v1060 = vadd.s32 %v1058, 4294967288
  %v1061 = vperm.slane %v550, %v1060
  %vm1062 = vcmask 130112
  %v1063 = vsel %vm1062, %v1061, %v1059
  %v1064 = vadd.s32 %v1058, 4294967280
  %v1065 = vperm.slane %v553, %v1064
  %vm1066 = vcmask 195712
  %v1067 = vsel %vm1066, %v1065, %v1063
  %v1068 = vadd.s32 %v1058, 4294967272
  %v1069 = vperm.slane %v556, %v1068
  %vm1070 = vcmask 261312
  %v1071 = vsel %vm1070, %v1069, %v1067
  %v1072 = vadd.s32 %v1058, 4294967264
  %v1073 = vperm.slane %v559, %v1072
  %vm1074 = vcmask 326912
  %v1075 = vsel %vm1074, %v1073, %v1071
  %v1076 = vadd.s32 %v1058, 4294967256
  %v1077 = vperm.slane %v562, %v1076
  %vm1078 = vcmask 392512
  %v1079 = vsel %vm1078, %v1077, %v1075
  %v1080 = vadd.s32 %v1058, 4294967248
  %v1081 = vperm.slane %v565, %v1080
  %vm1082 = vcmask 458112
  %v1083 = vsel %vm1082, %v1081, %v1079
  %v1084 = vadd.s32 %v1058, 4294967240
  %v1085 = vperm.slane %v568, %v1084
  %vm1086 = vcmask 523712
  %v1087 = vsel %vm1086, %v1085, %v1083
  %v1088 = vadd.s32 %v1058, 4294967232
  %v1089 = vperm.slane %v571, %v1088
  %vm1090 = vcmask 589312
  %v1091 = vsel %vm1090, %v1089, %v1087
  %v1092 = vadd.s32 %v1058, 4294967224
  %v1093 = vperm.slane %v574, %v1092
  %vm1094 = vcmask 654912
  %v1095 = vsel %vm1094, %v1093, %v1091
  %v1096 = vadd.s32 %v1058, 4294967216
  %v1097 = vperm.slane %v577, %v1096
  %vm1098 = vcmask 720512
  %v1099 = vsel %vm1098, %v1097, %v1095
  %v1100 = vadd.s32 %v1058, 4294967208
  %v1101 = vperm.slane %v580, %v1100
  %vm1102 = vcmask 786112
  %v1103 = vsel %vm1102, %v1101, %v1099
  %v1104 = vadd.s32 %v1058, 4294967200
  %v1105 = vperm.slane %v583, %v1104
  %vm1106 = vcmask 851712
  %v1107 = vsel %vm1106, %v1105, %v1103
  %v1108 = vadd.s32 %v1058, 4294967192
  %v1109 = vperm.slane %v586, %v1108
  %vm1110 = vcmask 917312
  %v1111 = vsel %vm1110, %v1109, %v1107
  %v1112 = vadd.s32 %v1058, 4294967184
  %v1113 = vperm.slane %v589, %v1112
  %vm1114 = vcmask 982912
  %v1115 = vsel %vm1114, %v1113, %v1111
  %v1116 = vadd.s32 %v1058, 4294967176
  %v1117 = vperm.slane %v592, %v1116
  %vm1118 = vcmask 1048512
  %v1119 = vsel %vm1118, %v1117, %v1115
  %v1120 = vperm.slane %v595, %v1058
  %v1121 = vperm.slane %v598, %v1060
  %v1122 = vsel %vm1062, %v1121, %v1120
  %v1123 = vperm.slane %v601, %v1064
  %v1124 = vsel %vm1066, %v1123, %v1122
  %v1125 = vperm.slane %v604, %v1068
  %v1126 = vsel %vm1070, %v1125, %v1124
  %v1127 = vperm.slane %v607, %v1072
  %v1128 = vsel %vm1074, %v1127, %v1126
  %v1129 = vperm.slane %v610, %v1076
  %v1130 = vsel %vm1078, %v1129, %v1128
  %v1131 = vperm.slane %v613, %v1080
  %v1132 = vsel %vm1082, %v1131, %v1130
  %v1133 = vperm.slane %v616, %v1084
  %v1134 = vsel %vm1086, %v1133, %v1132
  %v1135 = vperm.slane %v619, %v1088
  %v1136 = vsel %vm1090, %v1135, %v1134
  %v1137 = vperm.slane %v622, %v1092
  %v1138 = vsel %vm1094, %v1137, %v1136
  %v1139 = vperm.slane %v625, %v1096
  %v1140 = vsel %vm1098, %v1139, %v1138
  %v1141 = vperm.slane %v628, %v1100
  %v1142 = vsel %vm1102, %v1141, %v1140
  %v1143 = vperm.slane %v631, %v1104
  %v1144 = vsel %vm1106, %v1143, %v1142
  %v1145 = vperm.slane %v634, %v1108
  %v1146 = vsel %vm1110, %v1145, %v1144
  %v1147 = vperm.slane %v637, %v1112
  %v1148 = vsel %vm1114, %v1147, %v1146
  %v1149 = vperm.slane %v640, %v1116
  %v1150 = vsel %vm1118, %v1149, %v1148
  %v1151 = vperm.slane %v643, %v1058
  %v1152 = vperm.slane %v646, %v1060
  %v1153 = vsel %vm1062, %v1152, %v1151
  %v1154 = vperm.slane %v649, %v1064
  %v1155 = vsel %vm1066, %v1154, %v1153
  %v1156 = vperm.slane %v652, %v1068
  %v1157 = vsel %vm1070, %v1156, %v1155
  %v1158 = vperm.slane %v655, %v1072
  %v1159 = vsel %vm1074, %v1158, %v1157
  %v1160 = vperm.slane %v658, %v1076
  %v1161 = vsel %vm1078, %v1160, %v1159
  %v1162 = vperm.slane %v661, %v1080
  %v1163 = vsel %vm1082, %v1162, %v1161
  %v1164 = vperm.slane %v664, %v1084
  %v1165 = vsel %vm1086, %v1164, %v1163
  %v1166 = vperm.slane %v667, %v1088
  %v1167 = vsel %vm1090, %v1166, %v1165
  %v1168 = vperm.slane %v670, %v1092
  %v1169 = vsel %vm1094, %v1168, %v1167
  %v1170 = vperm.slane %v673, %v1096
  %v1171 = vsel %vm1098, %v1170, %v1169
  %v1172 = vperm.slane %v676, %v1100
  %v1173 = vsel %vm1102, %v1172, %v1171
  %v1174 = vperm.slane %v679, %v1104
  %v1175 = vsel %vm1106, %v1174, %v1173
  %v1176 = vperm.slane %v682, %v1108
  %v1177 = vsel %vm1110, %v1176, %v1175
  %v1178 = vperm.slane %v685, %v1112
  %v1179 = vsel %vm1114, %v1178, %v1177
  %v1180 = vperm.slane %v688, %v1116
  %v1181 = vsel %vm1118, %v1180, %v1179
  %v1182 = vperm.slane %v691, %v1058
  %v1183 = vperm.slane %v694, %v1060
  %v1184 = vsel %vm1062, %v1183, %v1182
  %v1185 = vperm.slane %v697, %v1064
  %v1186 = vsel %vm1066, %v1185, %v1184
  %v1187 = vperm.slane %v700, %v1068
  %v1188 = vsel %vm1070, %v1187, %v1186
  %v1189 = vperm.slane %v703, %v1072
  %v1190 = vsel %vm1074, %v1189, %v1188
  %v1191 = vperm.slane %v706, %v1076
  %v1192 = vsel %vm1078, %v1191, %v1190
  %v1193 = vperm.slane %v709, %v1080
  %v1194 = vsel %vm1082, %v1193, %v1192
  %v1195 = vperm.slane %v712, %v1084
  %v1196 = vsel %vm1086, %v1195, %v1194
  %v1197 = vperm.slane %v715, %v1088
  %v1198 = vsel %vm1090, %v1197, %v1196
  %v1199 = vperm.slane %v718, %v1092
  %v1200 = vsel %vm1094, %v1199, %v1198
  %v1201 = vperm.slane %v721, %v1096
  %v1202 = vsel %vm1098, %v1201, %v1200
  %v1203 = vperm.slane %v724, %v1100
  %v1204 = vsel %vm1102, %v1203, %v1202
  %v1205 = vperm.slane %v727, %v1104
  %v1206 = vsel %vm1106, %v1205, %v1204
  %v1207 = vperm.slane %v730, %v1108
  %v1208 = vsel %vm1110, %v1207, %v1206
  %v1209 = vperm.slane %v733, %v1112
  %v1210 = vsel %vm1114, %v1209, %v1208
  %v1211 = vperm.slane %v736, %v1116
  %v1212 = vsel %vm1118, %v1211, %v1210
  %v1213 = vperm.slane %v739, %v1058
  %v1214 = vperm.slane %v742, %v1060
  %v1215 = vsel %vm1062, %v1214, %v1213
  %v1216 = vperm.slane %v745, %v1064
  %v1217 = vsel %vm1066, %v1216, %v1215
  %v1218 = vperm.slane %v748, %v1068
  %v1219 = vsel %vm1070, %v1218, %v1217
  %v1220 = vperm.slane %v751, %v1072
  %v1221 = vsel %vm1074, %v1220, %v1219
  %v1222 = vperm.slane %v754, %v1076
  %v1223 = vsel %vm1078, %v1222, %v1221
  %v1224 = vperm.slane %v757, %v1080
  %v1225 = vsel %vm1082, %v1224, %v1223
  %v1226 = vperm.slane %v760, %v1084
  %v1227 = vsel %vm1086, %v1226, %v1225
  %v1228 = vperm.slane %v763, %v1088
  %v1229 = vsel %vm1090, %v1228, %v1227
  %v1230 = vperm.slane %v766, %v1092
  %v1231 = vsel %vm1094, %v1230, %v1229
  %v1232 = vperm.slane %v769, %v1096
  %v1233 = vsel %vm1098, %v1232, %v1231
  %v1234 = vperm.slane %v772, %v1100
  %v1235 = vsel %vm1102, %v1234, %v1233
  %v1236 = vperm.slane %v775, %v1104
  %v1237 = vsel %vm1106, %v1236, %v1235
  %v1238 = vperm.slane %v778, %v1108
  %v1239 = vsel %vm1110, %v1238, %v1237
  %v1240 = vperm.slane %v781, %v1112
  %v1241 = vsel %vm1114, %v1240, %v1239
  %v1242 = vperm.slane %v784, %v1116
  %v1243 = vsel %vm1118, %v1242, %v1241
  %v1244 = vperm.slane %v787, %v1058
  %v1245 = vperm.slane %v790, %v1060
  %v1246 = vsel %vm1062, %v1245, %v1244
  %v1247 = vperm.slane %v793, %v1064
  %v1248 = vsel %vm1066, %v1247, %v1246
  %v1249 = vperm.slane %v796, %v1068
  %v1250 = vsel %vm1070, %v1249, %v1248
  %v1251 = vperm.slane %v799, %v1072
  %v1252 = vsel %vm1074, %v1251, %v1250
  %v1253 = vperm.slane %v802, %v1076
  %v1254 = vsel %vm1078, %v1253, %v1252
  %v1255 = vperm.slane %v805, %v1080
  %v1256 = vsel %vm1082, %v1255, %v1254
  %v1257 = vperm.slane %v808, %v1084
  %v1258 = vsel %vm1086, %v1257, %v1256
  %v1259 = vperm.slane %v811, %v1088
  %v1260 = vsel %vm1090, %v1259, %v1258
  %v1261 = vperm.slane %v814, %v1092
  %v1262 = vsel %vm1094, %v1261, %v1260
  %v1263 = vperm.slane %v817, %v1096
  %v1264 = vsel %vm1098, %v1263, %v1262
  %v1265 = vperm.slane %v820, %v1100
  %v1266 = vsel %vm1102, %v1265, %v1264
  %v1267 = vperm.slane %v823, %v1104
  %v1268 = vsel %vm1106, %v1267, %v1266
  %v1269 = vperm.slane %v826, %v1108
  %v1270 = vsel %vm1110, %v1269, %v1268
  %v1271 = vperm.slane %v829, %v1112
  %v1272 = vsel %vm1114, %v1271, %v1270
  %v1273 = vperm.slane %v832, %v1116
  %v1274 = vsel %vm1118, %v1273, %v1272
  %v1275 = vperm.slane %v835, %v1058
  %v1276 = vperm.slane %v838, %v1060
  %v1277 = vsel %vm1062, %v1276, %v1275
  %v1278 = vperm.slane %v841, %v1064
  %v1279 = vsel %vm1066, %v1278, %v1277
  %v1280 = vperm.slane %v844, %v1068
  %v1281 = vsel %vm1070, %v1280, %v1279
  %v1282 = vperm.slane %v847, %v1072
  %v1283 = vsel %vm1074, %v1282, %v1281
  %v1284 = vperm.slane %v850, %v1076
  %v1285 = vsel %vm1078, %v1284, %v1283
  %v1286 = vperm.slane %v853, %v1080
  %v1287 = vsel %vm1082, %v1286, %v1285
  %v1288 = vperm.slane %v856, %v1084
  %v1289 = vsel %vm1086, %v1288, %v1287
  %v1290 = vperm.slane %v859, %v1088
  %v1291 = vsel %vm1090, %v1290, %v1289
  %v1292 = vperm.slane %v862, %v1092
  %v1293 = vsel %vm1094, %v1292, %v1291
  %v1294 = vperm.slane %v865, %v1096
  %v1295 = vsel %vm1098, %v1294, %v1293
  %v1296 = vperm.slane %v868, %v1100
  %v1297 = vsel %vm1102, %v1296, %v1295
  %v1298 = vperm.slane %v871, %v1104
  %v1299 = vsel %vm1106, %v1298, %v1297
  %v1300 = vperm.slane %v874, %v1108
  %v1301 = vsel %vm1110, %v1300, %v1299
  %v1302 = vperm.slane %v877, %v1112
  %v1303 = vsel %vm1114, %v1302, %v1301
  %v1304 = vperm.slane %v880, %v1116
  %v1305 = vsel %vm1118, %v1304, %v1303
  %v1306 = vperm.slane %v883, %v1058
  %v1307 = vperm.slane %v886, %v1060
  %v1308 = vsel %vm1062, %v1307, %v1306
  %v1309 = vperm.slane %v889, %v1064
  %v1310 = vsel %vm1066, %v1309, %v1308
  %v1311 = vperm.slane %v892, %v1068
  %v1312 = vsel %vm1070, %v1311, %v1310
  %v1313 = vperm.slane %v895, %v1072
  %v1314 = vsel %vm1074, %v1313, %v1312
  %v1315 = vperm.slane %v898, %v1076
  %v1316 = vsel %vm1078, %v1315, %v1314
  %v1317 = vperm.slane %v901, %v1080
  %v1318 = vsel %vm1082, %v1317, %v1316
  %v1319 = vperm.slane %v904, %v1084
  %v1320 = vsel %vm1086, %v1319, %v1318
  %v1321 = vperm.slane %v907, %v1088
  %v1322 = vsel %vm1090, %v1321, %v1320
  %v1323 = vperm.slane %v910, %v1092
  %v1324 = vsel %vm1094, %v1323, %v1322
  %v1325 = vperm.slane %v913, %v1096
  %v1326 = vsel %vm1098, %v1325, %v1324
  %v1327 = vperm.slane %v916, %v1100
  %v1328 = vsel %vm1102, %v1327, %v1326
  %v1329 = vperm.slane %v919, %v1104
  %v1330 = vsel %vm1106, %v1329, %v1328
  %v1331 = vperm.slane %v922, %v1108
  %v1332 = vsel %vm1110, %v1331, %v1330
  %v1333 = vperm.slane %v925, %v1112
  %v1334 = vsel %vm1114, %v1333, %v1332
  %v1335 = vperm.slane %v928, %v1116
  %v1336 = vsel %vm1118, %v1335, %v1334
  %vm1337 = vcmask 1041409
  %v1338 = vsel %vm1337, %v1150, %v1119
  %vm1339 = vcmask 1042434
  %v1340 = vsel %vm1339, %v1181, %v1338
  %vm1341 = vcmask 1043459
  %v1342 = vsel %vm1341, %v1212, %v1340
  %vm1343 = vcmask 1044484
  %v1344 = vsel %vm1343, %v1243, %v1342
  %vm1345 = vcmask 1045509
  %v1346 = vsel %vm1345, %v1274, %v1344
  %vm1347 = vcmask 1046534
  %v1348 = vsel %vm1347, %v1305, %v1346
  %vm1349 = vcmask 1047559
  %v1350 = vsel %vm1349, %v1336, %v1348
  %v1352 = vld [vmem:[%s3] sm:$0xff]
  %v1353 = vld [vmem:[%s3 + $0x8] sm:$0xff]
  %v1354 = vld [vmem:[%s3 + $0x10] sm:$0xff]
  %v1355 = vld [vmem:[%s3 + $0x18] sm:$0xff]
  %vm1356 = vcmp.eq.s32.totalorder %v1352, 0
  %vm1357 = vcmp.eq.s32.totalorder %v1353, 0
  %vm1358 = vcmp.eq.s32.totalorder %v1354, 0
  %vm1359 = vcmp.eq.s32.totalorder %v1355, 0
  %v1360 = vsel %vm1356, -1e+09, %v95
  %v1361 = vsel %vm1357, -1e+09, %v108
  %v1362 = vsel %vm1358, -1e+09, %v121
  %v1363 = vsel %vm1359, -1e+09, %v1350
  %1364 = vst [vmem:[%s5] sm:$0xff] %v1360
  %1365 = vst [vmem:[%s5 + $0x8] sm:$0xff] %v1361
  %1366 = vst [vmem:[%s5 + $0x10] sm:$0xff] %v1362
  %1367 = vst [vmem:[%s5 + $0x18] sm:$0xff] %v1363
  // Predicated region
  $region22: #{_forward.1} parent=0 // pred_check
    _
  $region23: #{_forward.1} parent=0 // pred_check_branch
    %1369 = sbr.rel (0) target = $region25
  $region24: #{_forward.1} parent=0 // pred_region
    _
  $region25: #{_forward.1} parent=0 // pred_fallthru
    _
  // Predicated region
  $region26: #{_forward.1} parent=0 // pred_check
    _
  $region27: #{_forward.1} parent=0 // pred_check_branch
    %1371 = sbr.rel (0) target = $region29
  $region28: #{_forward.1} parent=0 // pred_region
    _
  $region29: #{_forward.1} parent=0 // pred_fallthru
    _

</llo_original>
